<compile_context>
chip_gen: v5e
topology: v5e:2x2
jax: 0.10.0
libtpu: 0.0.40
codegen_flags: <defaults>
</compile_context>

<pallas_src>
import jax
import jax.numpy as jnp
from jax.experimental import pallas as pl
from jax.experimental.pallas import tpu as pltpu


def _round_up(v, m):
    return (v + m - 1) // m * m


def _nc1_accum_kernel(x_ref, labels_ref, sums_ref, cnt_ref):
    """Accumulate per-class normalized-feature sums and counts for one tile.

    x_ref:      (TB, D)   feature tile
    labels_ref: (1, TB)   int32 labels tile (lane-dense)
    sums_ref:   (1, C, D) per-core running sum_{i in class c} xn_i
    cnt_ref:    (1, C, 1) per-core running class counts
    """
    t = pl.program_id(1)

    @pl.when(t == 0)
    def _init():
        sums_ref[...] = jnp.zeros_like(sums_ref)
        cnt_ref[...] = jnp.zeros_like(cnt_ref)

    x = x_ref[...].astype(jnp.float32)                       # (TB, D)
    labels = labels_ref[...]                                  # (1, TB) int32
    n_cls = sums_ref.shape[1]
    tb = x.shape[0]

    # Row L2-normalization with PyTorch eps semantics: v / (||v|| + 1e-10)
    # (eps added to the norm, NOT the squared norm). Zero padding rows
    # normalize to exactly zero.
    inv_norm = 1.0 / (jnp.sqrt(jnp.sum(x * x, axis=1, keepdims=True)) + 1e-10)
    xn = x * inv_norm                                         # (TB, D)

    # Transposed one-hot (C, TB): lane-dense compare; padded labels are -1 and
    # match no class.
    cls = jax.lax.broadcasted_iota(jnp.int32, (n_cls, tb), 0)
    mask_t = (labels == cls).astype(jnp.float32)              # (C, TB)

    # Per-class feature sums on the MXU: (C, TB) @ (TB, D) -> (C, D).
    # TODO(synk): if the caller holds bf16 features, cast xn / mask_t (exact)
    # to bf16 here for native-bf16 MXU throughput.
    csum = jax.lax.dot_general(
        mask_t, xn,
        dimension_numbers=(((1,), (0,)), ((), ())),
        preferred_element_type=jnp.float32)                   # (C, D)

    sums_ref[...] = sums_ref[...] + csum[None, :, :]
    cnt_ref[...] = cnt_ref[...] + jnp.sum(mask_t, axis=1, keepdims=True)[None, :, :]


def _nc1_finalize_kernel(sums_ref, cnt_ref, means_ref, loss_ref):
    """Combine per-core partials and emit the scalar loss (SMEM output)."""
    sums = jnp.sum(sums_ref[...], axis=0)                     # (C, D)
    cnt = jnp.sum(cnt_ref[...], axis=0)                       # (C, 1)

    m = means_ref[...].astype(jnp.float32)                    # (C, D)
    m_inv = 1.0 / (jnp.sqrt(jnp.sum(m * m, axis=1, keepdims=True)) + 1e-10)
    mn = m * m_inv

    # D_c = sum_{i in c} (1 - xn_i . mn_c) = count_c - mn_c . sum_{i in c} xn_i
    d_sum = cnt - jnp.sum(sums * mn, axis=1, keepdims=True)   # (C, 1)
    n_sq = (cnt + 1e-5) ** 2
    per_class = jnp.clip(d_sum / n_sq, 1e-12, 1e12)
    loss_ref[0, 0] = jnp.sum(per_class) / jnp.float32(means_ref.shape[0])


def nc1_loss_v1_cosine(x, labels, means, *, tile_b=512, num_core_splits=2):
    """Pallas implementation of NC1Loss_v1_cosine.forward.

    Args:
      x:      (B, D) feature matrix.
      labels: (B,)   integer class labels.
      means:  (C, D) class means (the module's parameter).
      tile_b: rows of x per pipelined block (rounded to a multiple of 128).
      num_core_splits: size of the leading "parallel" grid axis; 2 splits the
        memory-bound scan over both v7x TensorCores (harmless on v5e/v6e).
    Returns:
      (loss, means) -- loss is a float32 scalar, means is passed through.
    """
    b, d = x.shape
    c = means.shape[0]

    # --- choose the B tile ---------------------------------------------------
    # Labels block last dim and x block second-to-last dim -> tile must be a
    # multiple of 128. Keep the double-buffered f32 x tile under ~8 MiB so it
    # fits every generation's scoped-VMEM budget with plenty of headroom.
    tb_cap = max(128, ((8 << 20) // (2 * 4 * d)) // 128 * 128)
    tb = max(128, min(_round_up(tile_b, 128), tb_cap, _round_up(b, 128)))

    n_tiles = _round_up(pl.cdiv(b, tb), num_core_splits)
    tiles_per_core = n_tiles // num_core_splits
    b_pad = n_tiles * tb

    # --- pad B (zero rows / label -1 contribute nothing) ---------------------
    labels_i32 = labels.astype(jnp.int32)
    if b_pad != b:
        x_p = jnp.zeros((b_pad, d), x.dtype).at[:b].set(x)
        labels_p = jnp.full((b_pad,), -1, jnp.int32).at[:b].set(labels_i32)
    else:
        x_p, labels_p = x, labels_i32
    labels_row = labels_p.reshape(1, b_pad)                   # lane-dense labels

    # --- pass 1: tiled, double-buffered per-core class sums / counts ---------
    cost = pl.CostEstimate(
        flops=2 * b_pad * c * d + 6 * b_pad * d,
        transcendentals=b_pad,
        bytes_accessed=b_pad * d * x.dtype.itemsize + 4 * b_pad
        + 4 * num_core_splits * c * (d + 1),
    )
    sums, cnts = pl.pallas_call(
        _nc1_accum_kernel,
        out_shape=(
            jax.ShapeDtypeStruct((num_core_splits, c, d), jnp.float32),
            jax.ShapeDtypeStruct((num_core_splits, c, 1), jnp.float32),
        ),
        grid=(num_core_splits, tiles_per_core),
        in_specs=[
            pl.BlockSpec((tb, d), lambda core, t: (core * tiles_per_core + t, 0)),
            pl.BlockSpec((1, tb), lambda core, t: (0, core * tiles_per_core + t)),
        ],
        out_specs=(
            pl.BlockSpec((1, c, d), lambda core, t: (core, 0, 0)),
            pl.BlockSpec((1, c, 1), lambda core, t: (core, 0, 0)),
        ),
        compiler_params=pltpu.CompilerParams(
            dimension_semantics=("parallel", "arbitrary"),
            vmem_limit_bytes=32 * 1024 * 1024,
        ),
        cost_estimate=cost,
    )(x_p, labels_row)

    # --- pass 2: tiny gridless epilogue -> scalar loss through SMEM ----------
    loss = pl.pallas_call(
        _nc1_finalize_kernel,
        out_shape=jax.ShapeDtypeStruct((1, 1), jnp.float32),
        in_specs=[
            pl.BlockSpec(memory_space=pltpu.MemorySpace.VMEM),  # per-core sums
            pl.BlockSpec(memory_space=pltpu.MemorySpace.VMEM),  # per-core counts
            pl.BlockSpec(memory_space=pltpu.MemorySpace.VMEM),  # means
        ],
        out_specs=pl.BlockSpec(memory_space=pltpu.MemorySpace.SMEM),
    )(sums, cnts, means)[0, 0]

    return loss, means


if __name__ == "__main__":
    # Small deterministic example consistent with the module defaults
    # (num_classes=10, feat_dim=128) and a small batch.
    key = jax.random.PRNGKey(0)
    kx, kl, km = jax.random.split(key, 3)
    B, C, D = 16, 10, 128
    x = jax.random.normal(kx, (B, D), dtype=jnp.float32)
    labels = jax.random.randint(kl, (B,), 0, C, dtype=jnp.int32)
    means = jax.random.normal(km, (C, D), dtype=jnp.float32)

    loss, means_out = nc1_loss_v1_cosine(x, labels, means)
    jax.block_until_ready((loss, means_out))

    # Pure-JAX reference (same math as the PyTorch module).
    xn_ref = x / (jnp.linalg.norm(x, axis=1, keepdims=True) + 1e-10)
    mn_ref = means / (jnp.linalg.norm(means, axis=1, keepdims=True) + 1e-10)
    distmat_ref = 1.0 - xn_ref @ mn_ref.T
    mask_ref = (labels[:, None] == jnp.arange(C)[None, :]).astype(jnp.float32)
    d_ref = jnp.sum(distmat_ref * mask_ref, axis=0)
    n_ref = (mask_ref.sum(axis=0) + 1e-5) ** 2
    loss_ref = jnp.sum(jnp.clip(d_ref / n_ref, 1e-12, 1e12)) / C

    assert jnp.allclose(loss, loss_ref, atol=1e-5, rtol=1e-5), (loss, loss_ref)
    assert jnp.allclose(means_out, means), "means passthrough mismatch"

    print("KERNEL_OK")
</pallas_src>

<mosaic_0001>
module attributes {stable_mosaic.version = 11 : i64} {
  func.func @_nc1_accum_kernel(%arg0: i32, %arg1: i32, %arg2: memref<128x128xf32, #tpu.memory_space<vmem>>, %arg3: memref<1x128xi32, #tpu.memory_space<vmem>>, %arg4: memref<1x10x128xf32, #tpu.memory_space<vmem>>, %arg5: memref<1x10x1xf32, #tpu.memory_space<vmem>>) attributes {dimension_semantics = [#tpu.dimension_semantics<parallel>, #tpu.dimension_semantics<arbitrary>], iteration_bounds = array<i64: 2, 1>, scalar_prefetch = 0 : i64, scratch_operands = 0 : i64, tpu.core_type = #tpu.core_type<tc>, window_params = [{transform_indices = @transform_0, window_bounds = array<i64: 128, 128>}, {transform_indices = @transform_1, window_bounds = array<i64: 1, 128>}, {transform_indices = @transform_2, window_bounds = array<i64: 1, 10, 128>}, {transform_indices = @transform_3, window_bounds = array<i64: 1, 10, 1>}]} {
    %c0_i32 = arith.constant 0 : i32
    %0 = arith.cmpi eq, %arg1, %c0_i32 : i32
    %1 = arith.extui %0 : i1 to i32
    %c0_i32_0 = arith.constant 0 : i32
    %2 = arith.cmpi ne, %1, %c0_i32_0 : i32
    scf.if %2 {
      %cst_20 = arith.constant 0.000000e+00 : f32
      %31 = vector.broadcast %cst_20 : f32 to vector<1x10x128xf32>
      %c0_21 = arith.constant 0 : index
      %c0_22 = arith.constant 0 : index
      %c0_23 = arith.constant 0 : index
      %32 = vector.load %arg4[%c0_21, %c0_22, %c0_23] : memref<1x10x128xf32, #tpu.memory_space<vmem>>, vector<1x10x128xf32>
      tpu.vector_store %arg4[%c0_21, %c0_22, %c0_23], %31 {strides = array<i32>} : memref<1x10x128xf32, #tpu.memory_space<vmem>>, vector<1x10x128xf32>,
      %cst_24 = arith.constant 0.000000e+00 : f32
      %33 = vector.broadcast %cst_24 : f32 to vector<1x10x1xf32>
      %c0_25 = arith.constant 0 : index
      %c0_26 = arith.constant 0 : index
      %c0_27 = arith.constant 0 : index
      %34 = vector.load %arg5[%c0_25, %c0_26, %c0_27] : memref<1x10x1xf32, #tpu.memory_space<vmem>>, vector<1x10x1xf32>
      tpu.vector_store %arg5[%c0_25, %c0_26, %c0_27], %33 {strides = array<i32>} : memref<1x10x1xf32, #tpu.memory_space<vmem>>, vector<1x10x1xf32>,
    } else {
    }
    %c0 = arith.constant 0 : index
    %c0_1 = arith.constant 0 : index
    %3 = vector.load %arg2[%c0, %c0_1] : memref<128x128xf32, #tpu.memory_space<vmem>>, vector<128x128xf32>
    %c0_2 = arith.constant 0 : index
    %c0_3 = arith.constant 0 : index
    %4 = vector.load %arg3[%c0_2, %c0_3] : memref<1x128xi32, #tpu.memory_space<vmem>>, vector<1x128xi32>
    %5 = arith.mulf %3, %3 : vector<128x128xf32>
    %cst = arith.constant dense<0.000000e+00> : vector<128xf32>
    %6 = vector.multi_reduction <add>, %5, %cst [1] : vector<128x128xf32> to vector<128xf32>
    %7 = vector.shape_cast %6 : vector<128xf32> to vector<128x1xf32>
    %8 = math.sqrt %7 : vector<128x1xf32>
    %cst_4 = arith.constant 1.000000e-10 : f32
    %9 = vector.broadcast %cst_4 : f32 to vector<128x1xf32>
    %10 = arith.addf %8, %9 : vector<128x1xf32>
    %cst_5 = arith.constant 1.000000e+00 : f32
    %11 = vector.broadcast %cst_5 : f32 to vector<128x1xf32>
    %12 = arith.divf %11, %10 : vector<128x1xf32>
    %13 = vector.broadcast %12 : vector<128x1xf32> to vector<128x128xf32>
    %14 = arith.mulf %3, %13 : vector<128x128xf32>
    %15 = tpu.iota {dimensions = array<i32: 0>} : vector<10x128xi32>
    %16 = vector.broadcast %4 : vector<1x128xi32> to vector<10x128xi32>
    %17 = arith.cmpi eq, %16, %15 : vector<10x128xi32>
    %18 = arith.extui %17 : vector<10x128xi1> to vector<10x128xi32>
    %19 = arith.sitofp %18 : vector<10x128xi32> to vector<10x128xf32>
    %cst_6 = arith.constant dense<0.000000e+00> : vector<10x128xf32>
    %20 = tpu.matmul %19, %14, %cst_6 {dimension_numbers = #tpu.dot_dimension_numbers<[1], [0], [0], [1], [0, 0, 1, 1], [], []>} : vector<10x128xf32>, vector<128x128xf32>, vector<10x128xf32> -> vector<10x128xf32>
    %c0_7 = arith.constant 0 : index
    %c0_8 = arith.constant 0 : index
    %c0_9 = arith.constant 0 : index
    %21 = vector.load %arg4[%c0_7, %c0_8, %c0_9] : memref<1x10x128xf32, #tpu.memory_space<vmem>>, vector<1x10x128xf32>
    %22 = vector.shape_cast %20 : vector<10x128xf32> to vector<1x10x128xf32>
    %23 = arith.addf %21, %22 : vector<1x10x128xf32>
    %c0_10 = arith.constant 0 : index
    %c0_11 = arith.constant 0 : index
    %c0_12 = arith.constant 0 : index
    %24 = vector.load %arg4[%c0_10, %c0_11, %c0_12] : memref<1x10x128xf32, #tpu.memory_space<vmem>>, vector<1x10x128xf32>
    tpu.vector_store %arg4[%c0_10, %c0_11, %c0_12], %23 {strides = array<i32>} : memref<1x10x128xf32, #tpu.memory_space<vmem>>, vector<1x10x128xf32>,
    %c0_13 = arith.constant 0 : index
    %c0_14 = arith.constant 0 : index
    %c0_15 = arith.constant 0 : index
    %25 = vector.load %arg5[%c0_13, %c0_14, %c0_15] : memref<1x10x1xf32, #tpu.memory_space<vmem>>, vector<1x10x1xf32>
    %cst_16 = arith.constant dense<0.000000e+00> : vector<10xf32>
    %26 = vector.multi_reduction <add>, %19, %cst_16 [1] : vector<10x128xf32> to vector<10xf32>
    %27 = vector.shape_cast %26 : vector<10xf32> to vector<10x1xf32>
    %28 = vector.shape_cast %27 : vector<10x1xf32> to vector<1x10x1xf32>
    %29 = arith.addf %25, %28 : vector<1x10x1xf32>
    %c0_17 = arith.constant 0 : index
    %c0_18 = arith.constant 0 : index
    %c0_19 = arith.constant 0 : index
    %30 = vector.load %arg5[%c0_17, %c0_18, %c0_19] : memref<1x10x1xf32, #tpu.memory_space<vmem>>, vector<1x10x1xf32>
    tpu.vector_store %arg5[%c0_17, %c0_18, %c0_19], %29 {strides = array<i32>} : memref<1x10x1xf32, #tpu.memory_space<vmem>>, vector<1x10x1xf32>,
    return
  }
  func.func @transform_0(%arg0: i32, %arg1: i32) -> (i32, i32) {
    %c1_i32 = arith.constant 1 : i32
    %0 = arith.muli %arg0, %c1_i32 : i32
    %1 = arith.addi %0, %arg1 : i32
    %c0_i32 = arith.constant 0 : i32
    %c0_i32_0 = arith.constant 0 : i32
    return %1, %c0_i32 : i32, i32
  }
  func.func @transform_1(%arg0: i32, %arg1: i32) -> (i32, i32) {
    %c1_i32 = arith.constant 1 : i32
    %0 = arith.muli %arg0, %c1_i32 : i32
    %1 = arith.addi %0, %arg1 : i32
    %c0_i32 = arith.constant 0 : i32
    %c0_i32_0 = arith.constant 0 : i32
    return %c0_i32, %1 : i32, i32
  }
  func.func @transform_2(%arg0: i32, %arg1: i32) -> (i32, i32, i32) {
    %c0_i32 = arith.constant 0 : i32
    %c0_i32_0 = arith.constant 0 : i32
    %c0_i32_1 = arith.constant 0 : i32
    return %arg0, %c0_i32, %c0_i32_0 : i32, i32, i32
  }
  func.func @transform_3(%arg0: i32, %arg1: i32) -> (i32, i32, i32) {
    %c0_i32 = arith.constant 0 : i32
    %c0_i32_0 = arith.constant 0 : i32
    %c0_i32_1 = arith.constant 0 : i32
    return %arg0, %c0_i32, %c0_i32_0 : i32, i32, i32
  }
}

</mosaic_0001>

<llo_original>
// kernel: tpu_custom_call.1
$region0: #{tpu_custom_call.1}
  #allocation0 [shape = 'u32[]', space=smem, size = 0x4, offset = 0x4, fixed_abs, tag = 'smem constant byte address 0x4 - core index']
  #allocation1 [shape = 'u32[72,128]{1,0:T(1,128)}', space=vmem, size = 0x9000, scoped, tag = 'internal scratch']
  %s0 = inlined_call_operand.hbm [shape: f32[256,128], index: 0, kind: input, shape index: {}]
  %s1 = inlined_call_operand.hbm [shape: s32[1,256], index: 1, kind: input, shape index: {}]
  %s2 = inlined_call_operand.vmem [shape: f32[2,10,128], index: 2, kind: output, shape index: {0}]
  %s3 = inlined_call_operand.vmem [shape: f32[2,10,1], index: 3, kind: output, shape index: {1}]
  %4 = xla_tuple %s2, %s3
  %s5 = sld [smem:[#allocation0]]
  $region61: #{tpu_custom_call.1} parent=0
    _
  %s7 = ssub.s32 1, %s5
  %s8 = scalar_select 0, %s7, %s5
  $region1: #{tpu_custom_call.1} parent=0
    #allocation2 [shape = 'u8[131072]{0}', space=vmem, size = 0x20000, scoped, tag = 'input window, operand 0']
    #allocation3 [shape = 's32[2]{0}', space=sflag, size = 0x8, scoped, tag = 'scoped memory for tpu_custom_call.1']
    #allocation4 [shape = 'u8[1024]{0}', space=vmem, size = 0x400, scoped, tag = 'input window, operand 1']
    #allocation5 [shape = 's32[2]{0}', space=sflag, size = 0x8, scoped, tag = 'scoped memory for tpu_custom_call.1']
    %9 = vsyncpa [#allocation3], 0
    %s10 = scalar_lea.sflag [#allocation3], 1
    %11 = vsyncpa %s10, 0
    %12 = vsyncpa [#allocation5], 0
    %s13 = scalar_lea.sflag [#allocation5], 1
    %14 = vsyncpa %s13, 0
    loop: start=0, step=1, limit=4
    $region2: #{tpu_custom_call.1} parent=1 // loop_pre_header
      _
    $region3: #{tpu_custom_call.1} parent=1 // loop_header
      %s16 = sphi 0, %s20
      %p17 = scmp.ge.s32.totalorder %s16, 4
      %s23 = sphi 0, %s35
      %s24 = sphi 0, %s31
      %s25 = sphi 0, %s23
      %s26 = sphi 0, %s24
      %s27 = sphi 0, %s25
      %s28 = sphi 0, %s26
      %s40 = sphi 0, %s42
      %s43 = sphi 0, %s40
      %s44 = sphi 0, %s43
      %s60 = sphi 0, %s44
      %s68 = sphi 0, %s70
      %s71 = sphi 0, %s68
      %s72 = sphi 0, %s71
      %s88 = sphi 0, %s72
      %s94 = sphi 0, %s96
      %s97 = sphi 0, %s94
      %s98 = sphi 0, %s97
      %s114 = sphi 0, %s98
      %s120 = sphi 0, %s122
      %s123 = sphi 0, %s120
      %s124 = sphi 0, %s123
      %s140 = sphi 0, %s124
    $region4: #{tpu_custom_call.1} parent=1 // loop_header_branch
      %19 = sbr.rel (%p17) target = $region8
    $region5: #{tpu_custom_call.1} parent=1 // loop_body
      %s21 = ssub.s32 %s16, 1
      %s22 = ssub.s32 %s16, 2
      %s29 = sadd.s32 1, %s24
      %p30 = scmp.ge.s32.totalorder %s29, 1
      %s31 = scalar_select %p30, 0, %s29
      %s32 = sadd.s32 1, %s23
      %s33 = scalar_select %p30, %s32, %s23
      %p34 = scmp.ge.s32.totalorder %s33, 2
      %s35 = scalar_select %p34, 0, %s33
      %s36 = sadd.s32 %s23, %s24
      %s37 = sadd.s32 %s35, %s31
      %s38 = ssub.s32 %s36, %s37
      %p39 = scmp.eq.s32.totalorder %s38, 0
      %s41 = sadd.s32 %s40, 1
      %s42 = scalar_select %p39, %s40, %s41
      %p45 = pneg %p39
      %p46 = scmp.eq.s32.totalorder %s16, 1
      %p47 = por %p45, %p46
      %p48 = scmp.ne.s32.totalorder %s40, %s43
      %p49 = scmp.eq.s32.totalorder %s16, 0
      %p50 = por %p48, %p49
      %p51 = scmp.ne.s32.totalorder %s40, %s43
      %p52 = scmp.eq.s32.totalorder %s21, 1
      %p53 = por %p51, %p52
      %p54 = scmp.ne.s32.totalorder %s43, %s44
      %p55 = scmp.eq.s32.totalorder %s21, 0
      %p56 = por %p54, %p55
      %p57 = scmp.ne.s32.totalorder %s43, %s44
      %p58 = scmp.eq.s32.totalorder %s22, 1
      %p59 = por %p57, %p58
      %p61 = scmp.ne.s32.totalorder %s44, %s60
      %p62 = scmp.eq.s32.totalorder %s22, 0
      %p63 = por %p61, %p62
      %s64 = sadd.s32 %s23, %s24
      %s65 = sadd.s32 %s35, %s31
      %s66 = ssub.s32 %s64, %s65
      %p67 = scmp.eq.s32.totalorder %s66, 0
      %s69 = sadd.s32 %s68, 1
      %s70 = scalar_select %p67, %s68, %s69
      %p73 = pneg %p67
      %p74 = scmp.eq.s32.totalorder %s16, 1
      %p75 = por %p73, %p74
      %p76 = scmp.ne.s32.totalorder %s68, %s71
      %p77 = scmp.eq.s32.totalorder %s16, 0
      %p78 = por %p76, %p77
      %p79 = scmp.ne.s32.totalorder %s68, %s71
      %p80 = scmp.eq.s32.totalorder %s21, 1
      %p81 = por %p79, %p80
      %p82 = scmp.ne.s32.totalorder %s71, %s72
      %p83 = scmp.eq.s32.totalorder %s21, 0
      %p84 = por %p82, %p83
      %p85 = scmp.ne.s32.totalorder %s71, %s72
      %p86 = scmp.eq.s32.totalorder %s22, 1
      %p87 = por %p85, %p86
      %p89 = scmp.ne.s32.totalorder %s72, %s88
      %p90 = scmp.eq.s32.totalorder %s22, 0
      %p91 = por %p89, %p90
      %s92 = ssub.s32 %s23, %s35
      %p93 = scmp.eq.s32.totalorder %s92, 0
      %s95 = sadd.s32 %s94, 1
      %s96 = scalar_select %p93, %s94, %s95
      %p99 = pneg %p93
      %p100 = scmp.eq.s32.totalorder %s16, 1
      %p101 = por %p99, %p100
      %p102 = scmp.ne.s32.totalorder %s94, %s97
      %p103 = scmp.eq.s32.totalorder %s16, 0
      %p104 = por %p102, %p103
      %p105 = scmp.ne.s32.totalorder %s94, %s97
      %p106 = scmp.eq.s32.totalorder %s21, 1
      %p107 = por %p105, %p106
      %p108 = scmp.ne.s32.totalorder %s97, %s98
      %p109 = scmp.eq.s32.totalorder %s21, 0
      %p110 = por %p108, %p109
      %p111 = scmp.ne.s32.totalorder %s97, %s98
      %p112 = scmp.eq.s32.totalorder %s22, 1
      %p113 = por %p111, %p112
      %p115 = scmp.ne.s32.totalorder %s98, %s114
      %p116 = scmp.eq.s32.totalorder %s22, 0
      %p117 = por %p115, %p116
      %s118 = ssub.s32 %s23, %s35
      %p119 = scmp.eq.s32.totalorder %s118, 0
      %s121 = sadd.s32 %s120, 1
      %s122 = scalar_select %p119, %s120, %s121
      %p125 = pneg %p119
      %p126 = scmp.eq.s32.totalorder %s16, 1
      %p127 = por %p125, %p126
      %p128 = scmp.ne.s32.totalorder %s120, %s123
      %p129 = scmp.eq.s32.totalorder %s16, 0
      %p130 = por %p128, %p129
      %p131 = scmp.ne.s32.totalorder %s120, %s123
      %p132 = scmp.eq.s32.totalorder %s21, 1
      %p133 = por %p131, %p132
      %p134 = scmp.ne.s32.totalorder %s123, %s124
      %p135 = scmp.eq.s32.totalorder %s21, 0
      %p136 = por %p134, %p135
      %p137 = scmp.ne.s32.totalorder %s123, %s124
      %p138 = scmp.eq.s32.totalorder %s22, 1
      %p139 = por %p137, %p138
      %p141 = scmp.ne.s32.totalorder %s124, %s140
      %p142 = scmp.eq.s32.totalorder %s22, 0
      %p143 = por %p141, %p142
      %p144 = scmp.le.s32.totalorder 1, %s16
      %p145 = scmp.lt.s32.totalorder %s16, 3
      %p146 = pnand %p144, %p145
      %p147 = pneg %p146
      // Predicated region
      $region9: #{tpu_custom_call.1} parent=5 // pred_check
        _
      $region10: #{tpu_custom_call.1} parent=5 // pred_check_branch
        %149 = sbr.rel (%p146) target = $region12
      $region11: #{tpu_custom_call.1} parent=5 // pred_region
        %s150 = ssub.s32 %s16, 1
      $region12: #{tpu_custom_call.1} parent=5 // pred_fallthru
        _
      %p151 = scmp.lt.s32.totalorder %s16, 2
      // Predicated region
      $region13: #{tpu_custom_call.1} parent=5 // pred_check
        %p152 = pneg %p151
      $region14: #{tpu_custom_call.1} parent=5 // pred_check_branch
        %154 = sbr.rel (%p152) target = $region16
      $region15: #{tpu_custom_call.1} parent=5 // pred_region
        // Predicated region
        $region17: #{tpu_custom_call.1} parent=15 // pred_check
          %p155 = pneg %p50
        $region18: #{tpu_custom_call.1} parent=15 // pred_check_branch
          %157 = sbr.rel (%p155) target = $region20
        $region19: #{tpu_custom_call.1} parent=15 // pred_region
          %s158 = sand.u32 %s40, 1
          %s159 = scalar_lea.sflag [#allocation3], %s158
          %s160 = sand.u32 %s40, 1
          %s161 = smul.addr %s160, 128
          %s162 = scalar_lea.vmem [#allocation2], %s161
          %s163 = sadd.s32 %s23, %s24
          %s164 = smul.u32 16, %s163
          %166 = vsyncadd %s159, 0
          %s167 = smul.addr %s164, 8
          %s168 = scalar_lea.hbm %s0, %s167
          %s169 = sshll.u32 %s168, 4
          %s170 = int_to_ptr.hbm [resolvable:$true] %s169
          %s171 = sshll.u32 %s162, 4
          %s172 = int_to_ptr.vmem [resolvable:$true] %s171
          %177 = dma.hbm_to_vmem [thread:$0]  %s170, 2048, %s172, %s159, 128, 128, 8
        $region20: #{tpu_custom_call.1} parent=15 // pred_fallthru
          _
        // Predicated region
        $region21: #{tpu_custom_call.1} parent=15 // pred_check
          %p178 = pneg %p78
        $region22: #{tpu_custom_call.1} parent=15 // pred_check_branch
          %180 = sbr.rel (%p178) target = $region24
        $region23: #{tpu_custom_call.1} parent=15 // pred_region
          %s181 = sand.u32 %s68, 1
          %s182 = scalar_lea.sflag [#allocation5], %s181
          %s183 = sand.u32 %s68, 1
          %s184 = scalar_lea.vmem [#allocation4], %s183
          %s185 = sadd.s32 %s23, %s24
          %187 = vsyncadd %s182, 0
          %s188 = scalar_lea.hbm %s1, %s185
          %s190 = sshll.u32 %s188, 4
          %s191 = int_to_ptr.hbm [resolvable:$true] %s190
          %s192 = sshll.u32 %s184, 4
          %s193 = int_to_ptr.vmem [resolvable:$true] %s192
          %195 = dma.hbm_to_vmem [thread:$0]  %s191, 16, %s193, %s182
        $region24: #{tpu_custom_call.1} parent=15 // pred_fallthru
          _
      $region16: #{tpu_custom_call.1} parent=5 // pred_fallthru
        _
      %p196 = scmp.le.s32.totalorder 1, %s16
      %p197 = scmp.lt.s32.totalorder %s16, 3
      %p198 = pnand %p196, %p197
      %p199 = pneg %p198
      // Predicated region
      $region25: #{tpu_custom_call.1} parent=5 // pred_check
        _
      $region26: #{tpu_custom_call.1} parent=5 // pred_check_branch
        %201 = sbr.rel (%p198) target = $region28
      $region27: #{tpu_custom_call.1} parent=5 // pred_region
        %s202 = ssub.s32 %s16, 1
        %s203 = sand.u32 %s43, 1
        %s204 = scalar_lea.sflag [#allocation3], %s203
        %s205 = sand.u32 %s43, 1
        %s206 = smul.addr %s205, 128
        %s207 = scalar_lea.vmem [#allocation2], %s206
        // Predicated region
        $region29: #{tpu_custom_call.1} parent=27 // pred_check
          %p208 = pneg %p56
        $region30: #{tpu_custom_call.1} parent=27 // pred_check_branch
          %210 = sbr.rel (%p208) target = $region32
        $region31: #{tpu_custom_call.1} parent=27 // pred_region
          %212 = dma.done %s204, 2048
        $region32: #{tpu_custom_call.1} parent=27 // pred_fallthru
          _
        %s213 = sand.u32 %s71, 1
        %s214 = scalar_lea.sflag [#allocation5], %s213
        %s215 = sand.u32 %s71, 1
        %s216 = scalar_lea.vmem [#allocation4], %s215
        // Predicated region
        $region33: #{tpu_custom_call.1} parent=27 // pred_check
          %p217 = pneg %p84
        $region34: #{tpu_custom_call.1} parent=27 // pred_check_branch
          %219 = sbr.rel (%p217) target = $region36
        $region35: #{tpu_custom_call.1} parent=27 // pred_region
          %221 = dma.done %s214, 16
        $region36: #{tpu_custom_call.1} parent=27 // pred_fallthru
          _
        %s222 = sand.u32 %s43, 1
        %s223 = scalar_lea.sflag [#allocation3], %s222
        %s224 = sand.u32 %s43, 1
        %s225 = smul.addr %s224, 128
        %s226 = scalar_lea.vmem [#allocation2], %s225
        %p227 = pneg %p56
        %p228 = pneg %p53
        %s229 = sand.u32 %s71, 1
        %s230 = scalar_lea.sflag [#allocation5], %s229
        %s231 = sand.u32 %s71, 1
        %s232 = scalar_lea.vmem [#allocation4], %s231
        %p233 = pneg %p84
        %p234 = pneg %p81
        %p235 = pneg %p110
        %p236 = pneg %p107
        %p237 = scmp.lt.s32.totalorder %s25, 1
        %s238 = scalar_select %p237, %s25, 1
        %s239 = smul.addr %s238, 2
        %s240 = smul.addr %s239, 8
        %s241 = scalar_lea.vmem %s2, %s240
        %p242 = pneg %p136
        %p243 = pneg %p133
        %p244 = scmp.lt.s32.totalorder %s25, 1
        %s245 = scalar_select %p244, %s25, 1
        %s246 = smul.addr %s245, 2
        %s247 = smul.addr %s246, 8
        %s248 = scalar_lea.vmem %s3, %s247
        %s249 = sadd.s32 %s25, %s26
        %s250 = smul.u32 16, %s249
        %s251 = sadd.s32 %s25, %s26
        %p252 = scmp.lt.s32.totalorder %s25, 1
        %s253 = scalar_select %p252, %s25, 1
        %s254 = smul.addr %s253, 2
        %s255 = smul.addr %s254, 8
        %s256 = scalar_lea.vmem %s2, %s255
        %p257 = scmp.lt.s32.totalorder %s25, 1
        %s258 = scalar_select %p257, %s25, 1
        %s259 = smul.addr %s258, 2
        %s260 = smul.addr %s259, 8
        %s261 = scalar_lea.vmem %s3, %s260
        %p262 = scmp.eq.s32.totalorder %s26, 0
        // Predicated region
        $region37: #{tpu_custom_call.1} parent=27 // pred_check
          %p263 = pneg %p262
        $region38: #{tpu_custom_call.1} parent=27 // pred_check_branch
          %265 = sbr.rel (%p263) target = $region40
        $region39: #{tpu_custom_call.1} parent=27 // pred_region
          %266 = vst [vmem:[%s256] sm:$0xff] 0.0
          %267 = vst [vmem:[%s256 + $0x8] sm:$0x3] 0.0
          %vm268 = vcmask 7168
          %269 = vst.msk [vmem:[%s261] sm:$0xff] %vm268, 0.0
          %vm270 = vcmask 1024
          %271 = vst.msk [vmem:[%s261 + $0x8] sm:$0x3] %vm270, 0.0
        $region40: #{tpu_custom_call.1} parent=27 // pred_fallthru
          _
        %v272 = vld [vmem:[%s207] sm:$0xff]
        %v273 = vld [vmem:[%s207 + $0x8] sm:$0xff]
        %v274 = vld [vmem:[%s207 + $0x10] sm:$0xff]
        %v275 = vld [vmem:[%s207 + $0x18] sm:$0xff]
        %v276 = vld [vmem:[%s207 + $0x20] sm:$0xff]
        %v277 = vld [vmem:[%s207 + $0x28] sm:$0xff]
        %v278 = vld [vmem:[%s207 + $0x30] sm:$0xff]
        %v279 = vld [vmem:[%s207 + $0x38] sm:$0xff]
        %v280 = vld [vmem:[%s207 + $0x40] sm:$0xff]
        %v281 = vld [vmem:[%s207 + $0x48] sm:$0xff]
        %v282 = vld [vmem:[%s207 + $0x50] sm:$0xff]
        %v283 = vld [vmem:[%s207 + $0x58] sm:$0xff]
        %v284 = vld [vmem:[%s207 + $0x60] sm:$0xff]
        %v285 = vld [vmem:[%s207 + $0x68] sm:$0xff]
        %v286 = vld [vmem:[%s207 + $0x70] sm:$0xff]
        %v287 = vld [vmem:[%s207 + $0x78] sm:$0xff]
        %v288 = vld [vmem:[%s216] sm:$0x1]
        %v289 = vmul.f32 %v272, %v272
        %v290 = vmul.f32 %v273, %v273
        %v291 = vmul.f32 %v274, %v274
        %v292 = vmul.f32 %v275, %v275
        %v293 = vmul.f32 %v276, %v276
        %v294 = vmul.f32 %v277, %v277
        %v295 = vmul.f32 %v278, %v278
        %v296 = vmul.f32 %v279, %v279
        %v297 = vmul.f32 %v280, %v280
        %v298 = vmul.f32 %v281, %v281
        %v299 = vmul.f32 %v282, %v282
        %v300 = vmul.f32 %v283, %v283
        %v301 = vmul.f32 %v284, %v284
        %v302 = vmul.f32 %v285, %v285
        %v303 = vmul.f32 %v286, %v286
        %v304 = vmul.f32 %v287, %v287
        %305 = vadd.xlane.f32.xlu0 %v289
        %v306 = vpop.xlane.xlu0 %305
        %307 = vadd.xlane.f32.xlu0 %v290
        %v308 = vpop.xlane.xlu0 %307
        %309 = vadd.xlane.f32.xlu0 %v291
        %v310 = vpop.xlane.xlu0 %309
        %311 = vadd.xlane.f32.xlu0 %v292
        %v312 = vpop.xlane.xlu0 %311
        %313 = vadd.xlane.f32.xlu0 %v293
        %v314 = vpop.xlane.xlu0 %313
        %315 = vadd.xlane.f32.xlu0 %v294
        %v316 = vpop.xlane.xlu0 %315
        %317 = vadd.xlane.f32.xlu0 %v295
        %v318 = vpop.xlane.xlu0 %317
        %319 = vadd.xlane.f32.xlu0 %v296
        %v320 = vpop.xlane.xlu0 %319
        %321 = vadd.xlane.f32.xlu0 %v297
        %v322 = vpop.xlane.xlu0 %321
        %323 = vadd.xlane.f32.xlu0 %v298
        %v324 = vpop.xlane.xlu0 %323
        %325 = vadd.xlane.f32.xlu0 %v299
        %v326 = vpop.xlane.xlu0 %325
        %327 = vadd.xlane.f32.xlu0 %v300
        %v328 = vpop.xlane.xlu0 %327
        %329 = vadd.xlane.f32.xlu0 %v301
        %v330 = vpop.xlane.xlu0 %329
        %331 = vadd.xlane.f32.xlu0 %v302
        %v332 = vpop.xlane.xlu0 %331
        %333 = vadd.xlane.f32.xlu0 %v303
        %v334 = vpop.xlane.xlu0 %333
        %335 = vadd.xlane.f32.xlu0 %v304
        %v336 = vpop.xlane.xlu0 %335
        %v337 = vrsqrt.pop %v306
        %v338 = vmul.f32 %v337, %v306
        %v339 = vmul.f32 %v338, %v337
        %v340 = vmul.f32 0.5, %v339
        %v341 = vsub.f32 1.5, %v340
        %v342 = vmul.f32 %v337, %v341
        %v343 = vmul.f32 %v306, %v342
        %vm344 = vcmp.eq.f32.partialorder %v306, inf
        %v345 = vsel %vm344, %v306, %v343
        %vm346 = vcmp.eq.f32.partialorder %v306, 0.0
        %v347 = vand.u32 %v306, 2147483648
        %v348 = vsel %vm346, %v347, %v345
        %v349 = vrsqrt.pop %v308
        %v350 = vmul.f32 %v349, %v308
        %v351 = vmul.f32 %v350, %v349
        %v352 = vmul.f32 0.5, %v351
        %v353 = vsub.f32 1.5, %v352
        %v354 = vmul.f32 %v349, %v353
        %v355 = vmul.f32 %v308, %v354
        %vm356 = vcmp.eq.f32.partialorder %v308, inf
        %v357 = vsel %vm356, %v308, %v355
        %vm358 = vcmp.eq.f32.partialorder %v308, 0.0
        %v359 = vand.u32 %v308, 2147483648
        %v360 = vsel %vm358, %v359, %v357
        %v361 = vrsqrt.pop %v310
        %v362 = vmul.f32 %v361, %v310
        %v363 = vmul.f32 %v362, %v361
        %v364 = vmul.f32 0.5, %v363
        %v365 = vsub.f32 1.5, %v364
        %v366 = vmul.f32 %v361, %v365
        %v367 = vmul.f32 %v310, %v366
        %vm368 = vcmp.eq.f32.partialorder %v310, inf
        %v369 = vsel %vm368, %v310, %v367
        %vm370 = vcmp.eq.f32.partialorder %v310, 0.0
        %v371 = vand.u32 %v310, 2147483648
        %v372 = vsel %vm370, %v371, %v369
        %v373 = vrsqrt.pop %v312
        %v374 = vmul.f32 %v373, %v312
        %v375 = vmul.f32 %v374, %v373
        %v376 = vmul.f32 0.5, %v375
        %v377 = vsub.f32 1.5, %v376
        %v378 = vmul.f32 %v373, %v377
        %v379 = vmul.f32 %v312, %v378
        %vm380 = vcmp.eq.f32.partialorder %v312, inf
        %v381 = vsel %vm380, %v312, %v379
        %vm382 = vcmp.eq.f32.partialorder %v312, 0.0
        %v383 = vand.u32 %v312, 2147483648
        %v384 = vsel %vm382, %v383, %v381
        %v385 = vrsqrt.pop %v314
        %v386 = vmul.f32 %v385, %v314
        %v387 = vmul.f32 %v386, %v385
        %v388 = vmul.f32 0.5, %v387
        %v389 = vsub.f32 1.5, %v388
        %v390 = vmul.f32 %v385, %v389
        %v391 = vmul.f32 %v314, %v390
        %vm392 = vcmp.eq.f32.partialorder %v314, inf
        %v393 = vsel %vm392, %v314, %v391
        %vm394 = vcmp.eq.f32.partialorder %v314, 0.0
        %v395 = vand.u32 %v314, 2147483648
        %v396 = vsel %vm394, %v395, %v393
        %v397 = vrsqrt.pop %v316
        %v398 = vmul.f32 %v397, %v316
        %v399 = vmul.f32 %v398, %v397
        %v400 = vmul.f32 0.5, %v399
        %v401 = vsub.f32 1.5, %v400
        %v402 = vmul.f32 %v397, %v401
        %v403 = vmul.f32 %v316, %v402
        %vm404 = vcmp.eq.f32.partialorder %v316, inf
        %v405 = vsel %vm404, %v316, %v403
        %vm406 = vcmp.eq.f32.partialorder %v316, 0.0
        %v407 = vand.u32 %v316, 2147483648
        %v408 = vsel %vm406, %v407, %v405
        %v409 = vrsqrt.pop %v318
        %v410 = vmul.f32 %v409, %v318
        %v411 = vmul.f32 %v410, %v409
        %v412 = vmul.f32 0.5, %v411
        %v413 = vsub.f32 1.5, %v412
        %v414 = vmul.f32 %v409, %v413
        %v415 = vmul.f32 %v318, %v414
        %vm416 = vcmp.eq.f32.partialorder %v318, inf
        %v417 = vsel %vm416, %v318, %v415
        %vm418 = vcmp.eq.f32.partialorder %v318, 0.0
        %v419 = vand.u32 %v318, 2147483648
        %v420 = vsel %vm418, %v419, %v417
        %v421 = vrsqrt.pop %v320
        %v422 = vmul.f32 %v421, %v320
        %v423 = vmul.f32 %v422, %v421
        %v424 = vmul.f32 0.5, %v423
        %v425 = vsub.f32 1.5, %v424
        %v426 = vmul.f32 %v421, %v425
        %v427 = vmul.f32 %v320, %v426
        %vm428 = vcmp.eq.f32.partialorder %v320, inf
        %v429 = vsel %vm428, %v320, %v427
        %vm430 = vcmp.eq.f32.partialorder %v320, 0.0
        %v431 = vand.u32 %v320, 2147483648
        %v432 = vsel %vm430, %v431, %v429
        %v433 = vrsqrt.pop %v322
        %v434 = vmul.f32 %v433, %v322
        %v435 = vmul.f32 %v434, %v433
        %v436 = vmul.f32 0.5, %v435
        %v437 = vsub.f32 1.5, %v436
        %v438 = vmul.f32 %v433, %v437
        %v439 = vmul.f32 %v322, %v438
        %vm440 = vcmp.eq.f32.partialorder %v322, inf
        %v441 = vsel %vm440, %v322, %v439
        %vm442 = vcmp.eq.f32.partialorder %v322, 0.0
        %v443 = vand.u32 %v322, 2147483648
        %v444 = vsel %vm442, %v443, %v441
        %v445 = vrsqrt.pop %v324
        %v446 = vmul.f32 %v445, %v324
        %v447 = vmul.f32 %v446, %v445
        %v448 = vmul.f32 0.5, %v447
        %v449 = vsub.f32 1.5, %v448
        %v450 = vmul.f32 %v445, %v449
        %v451 = vmul.f32 %v324, %v450
        %vm452 = vcmp.eq.f32.partialorder %v324, inf
        %v453 = vsel %vm452, %v324, %v451
        %vm454 = vcmp.eq.f32.partialorder %v324, 0.0
        %v455 = vand.u32 %v324, 2147483648
        %v456 = vsel %vm454, %v455, %v453
        %v457 = vrsqrt.pop %v326
        %v458 = vmul.f32 %v457, %v326
        %v459 = vmul.f32 %v458, %v457
        %v460 = vmul.f32 0.5, %v459
        %v461 = vsub.f32 1.5, %v460
        %v462 = vmul.f32 %v457, %v461
        %v463 = vmul.f32 %v326, %v462
        %vm464 = vcmp.eq.f32.partialorder %v326, inf
        %v465 = vsel %vm464, %v326, %v463
        %vm466 = vcmp.eq.f32.partialorder %v326, 0.0
        %v467 = vand.u32 %v326, 2147483648
        %v468 = vsel %vm466, %v467, %v465
        %v469 = vrsqrt.pop %v328
        %v470 = vmul.f32 %v469, %v328
        %v471 = vmul.f32 %v470, %v469
        %v472 = vmul.f32 0.5, %v471
        %v473 = vsub.f32 1.5, %v472
        %v474 = vmul.f32 %v469, %v473
        %v475 = vmul.f32 %v328, %v474
        %vm476 = vcmp.eq.f32.partialorder %v328, inf
        %v477 = vsel %vm476, %v328, %v475
        %vm478 = vcmp.eq.f32.partialorder %v328, 0.0
        %v479 = vand.u32 %v328, 2147483648
        %v480 = vsel %vm478, %v479, %v477
        %v481 = vrsqrt.pop %v330
        %v482 = vmul.f32 %v481, %v330
        %v483 = vmul.f32 %v482, %v481
        %v484 = vmul.f32 0.5, %v483
        %v485 = vsub.f32 1.5, %v484
        %v486 = vmul.f32 %v481, %v485
        %v487 = vmul.f32 %v330, %v486
        %vm488 = vcmp.eq.f32.partialorder %v330, inf
        %v489 = vsel %vm488, %v330, %v487
        %vm490 = vcmp.eq.f32.partialorder %v330, 0.0
        %v491 = vand.u32 %v330, 2147483648
        %v492 = vsel %vm490, %v491, %v489
        %v493 = vrsqrt.pop %v332
        %v494 = vmul.f32 %v493, %v332
        %v495 = vmul.f32 %v494, %v493
        %v496 = vmul.f32 0.5, %v495
        %v497 = vsub.f32 1.5, %v496
        %v498 = vmul.f32 %v493, %v497
        %v499 = vmul.f32 %v332, %v498
        %vm500 = vcmp.eq.f32.partialorder %v332, inf
        %v501 = vsel %vm500, %v332, %v499
        %vm502 = vcmp.eq.f32.partialorder %v332, 0.0
        %v503 = vand.u32 %v332, 2147483648
        %v504 = vsel %vm502, %v503, %v501
        %v505 = vrsqrt.pop %v334
        %v506 = vmul.f32 %v505, %v334
        %v507 = vmul.f32 %v506, %v505
        %v508 = vmul.f32 0.5, %v507
        %v509 = vsub.f32 1.5, %v508
        %v510 = vmul.f32 %v505, %v509
        %v511 = vmul.f32 %v334, %v510
        %vm512 = vcmp.eq.f32.partialorder %v334, inf
        %v513 = vsel %vm512, %v334, %v511
        %vm514 = vcmp.eq.f32.partialorder %v334, 0.0
        %v515 = vand.u32 %v334, 2147483648
        %v516 = vsel %vm514, %v515, %v513
        %v517 = vrsqrt.pop %v336
        %v518 = vmul.f32 %v517, %v336
        %v519 = vmul.f32 %v518, %v517
        %v520 = vmul.f32 0.5, %v519
        %v521 = vsub.f32 1.5, %v520
        %v522 = vmul.f32 %v517, %v521
        %v523 = vmul.f32 %v336, %v522
        %vm524 = vcmp.eq.f32.partialorder %v336, inf
        %v525 = vsel %vm524, %v336, %v523
        %vm526 = vcmp.eq.f32.partialorder %v336, 0.0
        %v527 = vand.u32 %v336, 2147483648
        %v528 = vsel %vm526, %v527, %v525
        %v529 = vadd.f32 %v348, 1e-10
        %v530 = vadd.f32 %v360, 1e-10
        %v531 = vadd.f32 %v372, 1e-10
        %v532 = vadd.f32 %v384, 1e-10
        %v533 = vadd.f32 %v396, 1e-10
        %v534 = vadd.f32 %v408, 1e-10
        %v535 = vadd.f32 %v420, 1e-10
        %v536 = vadd.f32 %v432, 1e-10
        %v537 = vadd.f32 %v444, 1e-10
        %v538 = vadd.f32 %v456, 1e-10
        %v539 = vadd.f32 %v468, 1e-10
        %v540 = vadd.f32 %v480, 1e-10
        %v541 = vadd.f32 %v492, 1e-10
        %v542 = vadd.f32 %v504, 1e-10
        %v543 = vadd.f32 %v516, 1e-10
        %v544 = vadd.f32 %v528, 1e-10
        %v545 = vrcp.pop %v529
        %v546 = vmul.f32 %v529, %v545
        %v547 = vsub.f32 1.0, %v546
        %v548 = vmul.f32 %v545, %v547
        %v549 = vadd.f32 %v545, %v548
        %vm550 = vweird.f32 %v529
        %vm551 = vweird.f32 %v545
        %vm552 = vmor %vm550, %vm551
        %v553 = vsel %vm552, %v545, %v549
        %v554 = vand.u32 2147483647, %v529
        %vm555 = vcmp.eq.f32.partialorder %v554, 8.507059e+37
        %v556 = vand.u32 %v529, 2147483648
        %v557 = vor.u32 1.1754944e-38, %v556
        %v558 = vsel %vm555, %v557, %v553
        %v559 = vmul.f32 1.0, %v558
        %v560 = vrcp.pop %v530
        %v561 = vmul.f32 %v530, %v560
        %v562 = vsub.f32 1.0, %v561
        %v563 = vmul.f32 %v560, %v562
        %v564 = vadd.f32 %v560, %v563
        %vm565 = vweird.f32 %v530
        %vm566 = vweird.f32 %v560
        %vm567 = vmor %vm565, %vm566
        %v568 = vsel %vm567, %v560, %v564
        %v569 = vand.u32 2147483647, %v530
        %vm570 = vcmp.eq.f32.partialorder %v569, 8.507059e+37
        %v571 = vand.u32 %v530, 2147483648
        %v572 = vor.u32 1.1754944e-38, %v571
        %v573 = vsel %vm570, %v572, %v568
        %v574 = vmul.f32 1.0, %v573
        %v575 = vrcp.pop %v531
        %v576 = vmul.f32 %v531, %v575
        %v577 = vsub.f32 1.0, %v576
        %v578 = vmul.f32 %v575, %v577
        %v579 = vadd.f32 %v575, %v578
        %vm580 = vweird.f32 %v531
        %vm581 = vweird.f32 %v575
        %vm582 = vmor %vm580, %vm581
        %v583 = vsel %vm582, %v575, %v579
        %v584 = vand.u32 2147483647, %v531
        %vm585 = vcmp.eq.f32.partialorder %v584, 8.507059e+37
        %v586 = vand.u32 %v531, 2147483648
        %v587 = vor.u32 1.1754944e-38, %v586
        %v588 = vsel %vm585, %v587, %v583
        %v589 = vmul.f32 1.0, %v588
        %v590 = vrcp.pop %v532
        %v591 = vmul.f32 %v532, %v590
        %v592 = vsub.f32 1.0, %v591
        %v593 = vmul.f32 %v590, %v592
        %v594 = vadd.f32 %v590, %v593
        %vm595 = vweird.f32 %v532
        %vm596 = vweird.f32 %v590
        %vm597 = vmor %vm595, %vm596
        %v598 = vsel %vm597, %v590, %v594
        %v599 = vand.u32 2147483647, %v532
        %vm600 = vcmp.eq.f32.partialorder %v599, 8.507059e+37
        %v601 = vand.u32 %v532, 2147483648
        %v602 = vor.u32 1.1754944e-38, %v601
        %v603 = vsel %vm600, %v602, %v598
        %v604 = vmul.f32 1.0, %v603
        %v605 = vrcp.pop %v533
        %v606 = vmul.f32 %v533, %v605
        %v607 = vsub.f32 1.0, %v606
        %v608 = vmul.f32 %v605, %v607
        %v609 = vadd.f32 %v605, %v608
        %vm610 = vweird.f32 %v533
        %vm611 = vweird.f32 %v605
        %vm612 = vmor %vm610, %vm611
        %v613 = vsel %vm612, %v605, %v609
        %v614 = vand.u32 2147483647, %v533
        %vm615 = vcmp.eq.f32.partialorder %v614, 8.507059e+37
        %v616 = vand.u32 %v533, 2147483648
        %v617 = vor.u32 1.1754944e-38, %v616
        %v618 = vsel %vm615, %v617, %v613
        %v619 = vmul.f32 1.0, %v618
        %v620 = vrcp.pop %v534
        %v621 = vmul.f32 %v534, %v620
        %v622 = vsub.f32 1.0, %v621
        %v623 = vmul.f32 %v620, %v622
        %v624 = vadd.f32 %v620, %v623
        %vm625 = vweird.f32 %v534
        %vm626 = vweird.f32 %v620
        %vm627 = vmor %vm625, %vm626
        %v628 = vsel %vm627, %v620, %v624
        %v629 = vand.u32 2147483647, %v534
        %vm630 = vcmp.eq.f32.partialorder %v629, 8.507059e+37
        %v631 = vand.u32 %v534, 2147483648
        %v632 = vor.u32 1.1754944e-38, %v631
        %v633 = vsel %vm630, %v632, %v628
        %v634 = vmul.f32 1.0, %v633
        %v635 = vrcp.pop %v535
        %v636 = vmul.f32 %v535, %v635
        %v637 = vsub.f32 1.0, %v636
        %v638 = vmul.f32 %v635, %v637
        %v639 = vadd.f32 %v635, %v638
        %vm640 = vweird.f32 %v535
        %vm641 = vweird.f32 %v635
        %vm642 = vmor %vm640, %vm641
        %v643 = vsel %vm642, %v635, %v639
        %v644 = vand.u32 2147483647, %v535
        %vm645 = vcmp.eq.f32.partialorder %v644, 8.507059e+37
        %v646 = vand.u32 %v535, 2147483648
        %v647 = vor.u32 1.1754944e-38, %v646
        %v648 = vsel %vm645, %v647, %v643
        %v649 = vmul.f32 1.0, %v648
        %v650 = vrcp.pop %v536
        %v651 = vmul.f32 %v536, %v650
        %v652 = vsub.f32 1.0, %v651
        %v653 = vmul.f32 %v650, %v652
        %v654 = vadd.f32 %v650, %v653
        %vm655 = vweird.f32 %v536
        %vm656 = vweird.f32 %v650
        %vm657 = vmor %vm655, %vm656
        %v658 = vsel %vm657, %v650, %v654
        %v659 = vand.u32 2147483647, %v536
        %vm660 = vcmp.eq.f32.partialorder %v659, 8.507059e+37
        %v661 = vand.u32 %v536, 2147483648
        %v662 = vor.u32 1.1754944e-38, %v661
        %v663 = vsel %vm660, %v662, %v658
        %v664 = vmul.f32 1.0, %v663
        %v665 = vrcp.pop %v537
        %v666 = vmul.f32 %v537, %v665
        %v667 = vsub.f32 1.0, %v666
        %v668 = vmul.f32 %v665, %v667
        %v669 = vadd.f32 %v665, %v668
        %vm670 = vweird.f32 %v537
        %vm671 = vweird.f32 %v665
        %vm672 = vmor %vm670, %vm671
        %v673 = vsel %vm672, %v665, %v669
        %v674 = vand.u32 2147483647, %v537
        %vm675 = vcmp.eq.f32.partialorder %v674, 8.507059e+37
        %v676 = vand.u32 %v537, 2147483648
        %v677 = vor.u32 1.1754944e-38, %v676
        %v678 = vsel %vm675, %v677, %v673
        %v679 = vmul.f32 1.0, %v678
        %v680 = vrcp.pop %v538
        %v681 = vmul.f32 %v538, %v680
        %v682 = vsub.f32 1.0, %v681
        %v683 = vmul.f32 %v680, %v682
        %v684 = vadd.f32 %v680, %v683
        %vm685 = vweird.f32 %v538
        %vm686 = vweird.f32 %v680
        %vm687 = vmor %vm685, %vm686
        %v688 = vsel %vm687, %v680, %v684
        %v689 = vand.u32 2147483647, %v538
        %vm690 = vcmp.eq.f32.partialorder %v689, 8.507059e+37
        %v691 = vand.u32 %v538, 2147483648
        %v692 = vor.u32 1.1754944e-38, %v691
        %v693 = vsel %vm690, %v692, %v688
        %v694 = vmul.f32 1.0, %v693
        %v695 = vrcp.pop %v539
        %v696 = vmul.f32 %v539, %v695
        %v697 = vsub.f32 1.0, %v696
        %v698 = vmul.f32 %v695, %v697
        %v699 = vadd.f32 %v695, %v698
        %vm700 = vweird.f32 %v539
        %vm701 = vweird.f32 %v695
        %vm702 = vmor %vm700, %vm701
        %v703 = vsel %vm702, %v695, %v699
        %v704 = vand.u32 2147483647, %v539
        %vm705 = vcmp.eq.f32.partialorder %v704, 8.507059e+37
        %v706 = vand.u32 %v539, 2147483648
        %v707 = vor.u32 1.1754944e-38, %v706
        %v708 = vsel %vm705, %v707, %v703
        %v709 = vmul.f32 1.0, %v708
        %v710 = vrcp.pop %v540
        %v711 = vmul.f32 %v540, %v710
        %v712 = vsub.f32 1.0, %v711
        %v713 = vmul.f32 %v710, %v712
        %v714 = vadd.f32 %v710, %v713
        %vm715 = vweird.f32 %v540
        %vm716 = vweird.f32 %v710
        %vm717 = vmor %vm715, %vm716
        %v718 = vsel %vm717, %v710, %v714
        %v719 = vand.u32 2147483647, %v540
        %vm720 = vcmp.eq.f32.partialorder %v719, 8.507059e+37
        %v721 = vand.u32 %v540, 2147483648
        %v722 = vor.u32 1.1754944e-38, %v721
        %v723 = vsel %vm720, %v722, %v718
        %v724 = vmul.f32 1.0, %v723
        %v725 = vrcp.pop %v541
        %v726 = vmul.f32 %v541, %v725
        %v727 = vsub.f32 1.0, %v726
        %v728 = vmul.f32 %v725, %v727
        %v729 = vadd.f32 %v725, %v728
        %vm730 = vweird.f32 %v541
        %vm731 = vweird.f32 %v725
        %vm732 = vmor %vm730, %vm731
        %v733 = vsel %vm732, %v725, %v729
        %v734 = vand.u32 2147483647, %v541
        %vm735 = vcmp.eq.f32.partialorder %v734, 8.507059e+37
        %v736 = vand.u32 %v541, 2147483648
        %v737 = vor.u32 1.1754944e-38, %v736
        %v738 = vsel %vm735, %v737, %v733
        %v739 = vmul.f32 1.0, %v738
        %v740 = vrcp.pop %v542
        %v741 = vmul.f32 %v542, %v740
        %v742 = vsub.f32 1.0, %v741
        %v743 = vmul.f32 %v740, %v742
        %v744 = vadd.f32 %v740, %v743
        %vm745 = vweird.f32 %v542
        %vm746 = vweird.f32 %v740
        %vm747 = vmor %vm745, %vm746
        %v748 = vsel %vm747, %v740, %v744
        %v749 = vand.u32 2147483647, %v542
        %vm750 = vcmp.eq.f32.partialorder %v749, 8.507059e+37
        %v751 = vand.u32 %v542, 2147483648
        %v752 = vor.u32 1.1754944e-38, %v751
        %v753 = vsel %vm750, %v752, %v748
        %v754 = vmul.f32 1.0, %v753
        %v755 = vrcp.pop %v543
        %v756 = vmul.f32 %v543, %v755
        %v757 = vsub.f32 1.0, %v756
        %v758 = vmul.f32 %v755, %v757
        %v759 = vadd.f32 %v755, %v758
        %vm760 = vweird.f32 %v543
        %vm761 = vweird.f32 %v755
        %vm762 = vmor %vm760, %vm761
        %v763 = vsel %vm762, %v755, %v759
        %v764 = vand.u32 2147483647, %v543
        %vm765 = vcmp.eq.f32.partialorder %v764, 8.507059e+37
        %v766 = vand.u32 %v543, 2147483648
        %v767 = vor.u32 1.1754944e-38, %v766
        %v768 = vsel %vm765, %v767, %v763
        %v769 = vmul.f32 1.0, %v768
        %v770 = vrcp.pop %v544
        %v771 = vmul.f32 %v544, %v770
        %v772 = vsub.f32 1.0, %v771
        %v773 = vmul.f32 %v770, %v772
        %v774 = vadd.f32 %v770, %v773
        %vm775 = vweird.f32 %v544
        %vm776 = vweird.f32 %v770
        %vm777 = vmor %vm775, %vm776
        %v778 = vsel %vm777, %v770, %v774
        %v779 = vand.u32 2147483647, %v544
        %vm780 = vcmp.eq.f32.partialorder %v779, 8.507059e+37
        %v781 = vand.u32 %v544, 2147483648
        %v782 = vor.u32 1.1754944e-38, %v781
        %v783 = vsel %vm780, %v782, %v778
        %v784 = vmul.f32 1.0, %v783
        %v785 = vmul.f32 %v272, %v559
        %v786 = vmul.f32 %v273, %v574
        %v787 = vmul.f32 %v274, %v589
        %v788 = vmul.f32 %v275, %v604
        %v789 = vmul.f32 %v276, %v619
        %v790 = vmul.f32 %v277, %v634
        %v791 = vmul.f32 %v278, %v649
        %v792 = vmul.f32 %v279, %v664
        %v793 = vmul.f32 %v280, %v679
        %v794 = vmul.f32 %v281, %v694
        %v795 = vmul.f32 %v282, %v709
        %v796 = vmul.f32 %v283, %v724
        %v797 = vmul.f32 %v284, %v739
        %v798 = vmul.f32 %v285, %v754
        %v799 = vmul.f32 %v286, %v769
        %v800 = vmul.f32 %v287, %v784
        %v801 = vlaneseq
        %v802 = vshrl.u32 %v801, 7
        %v803 = vadd.s32 %v802, 8
        %v804 = vperm.slane %v288, 0
        %vm805 = vcmp.eq.s32.totalorder %v804, %v802
        %vm806 = vcmp.eq.s32.totalorder %v804, %v803
        %v807 = vsel %vm805, 1, 0
        %v808 = vsel %vm806, 1, 0
        %v809 = vcvt.s32.f32 %v807
        %v810 = vcvt.s32.f32 %v808
        %811 = vmatpush.msra.mxu0 %v800
        %812 = vmatpush.msra.mxu0 %v799
        %813 = vmatpush.msra.mxu0 %v798
        %814 = vmatpush.msra.mxu0 %v797
        %815 = vmatpush.msra.mxu0 %v796
        %816 = vmatpush.msra.mxu0 %v795
        %817 = vmatpush.msra.mxu0 %v794
        %818 = vmatpush.msra.mxu0 %v793
        %819 = vmatpush.msra.mxu0 %v792
        %820 = vmatpush.msra.mxu0 %v791
        %821 = vmatpush.msra.mxu0 %v790
        %822 = vmatpush.msra.mxu0 %v789
        %823 = vmatpush.msra.mxu0 %v788
        %824 = vmatpush.msra.mxu0 %v787
        %825 = vmatpush.msra.mxu0 %v786
        %826 = vmatpush.msra.mxu0 %v785
        %827 = vmatmul.f32.gmra.mxu0 %v809
        %v828 = vpop.f32.mrf.mxu0
        %v829 = vadd.f32 0.0, %v828
        %830 = vmatmul.f32.gmra.mxu0 %v810
        %v831 = vpop.f32.mrf.mxu0
        %v832 = vadd.f32 0.0, %v831
        %833 = vdwg.mxu0
        %v834 = vld [vmem:[%s256] sm:$0xff]
        %v835 = vld [vmem:[%s256 + $0x8] sm:$0x3]
        %v836 = vadd.f32 %v834, %v829
        %v837 = vadd.f32 %v835, %v832
        %838 = vst [vmem:[%s256] sm:$0xff] %v836
        %839 = vst [vmem:[%s256 + $0x8] sm:$0x3] %v837
        %v840 = vld [vmem:[%s261] sm:$0xff]
        %v841 = vld [vmem:[%s261 + $0x8] sm:$0x3]
        %842 = vadd.xlane.f32.xlu0 %v809
        %v843 = vpop.xlane.xlu0 %842
        %vm844 = vcmask 1041408
        %v845 = vsel %vm844, %v810, 0.0
        %846 = vadd.xlane.f32.xlu0 %v845
        %v847 = vpop.xlane.xlu0 %846
        %v848 = vadd.f32 %v840, %v843
        %v849 = vadd.f32 %v841, %v847
        %vm850 = vcmask 7168
        %851 = vst.msk [vmem:[%s261] sm:$0xff] %vm850, %v848
        %vm852 = vcmask 1024
        %853 = vst.msk [vmem:[%s261 + $0x8] sm:$0x3] %vm852, %v849
        %p854 = scmp.lt.s32.totalorder %s25, 1
        %s855 = scalar_select %p854, %s25, 1
        %s856 = smul.addr %s855, 2
        %s857 = smul.addr %s856, 8
        %s858 = scalar_lea.vmem %s2, %s857
        %p859 = scmp.lt.s32.totalorder %s25, 1
        %s860 = scalar_select %p859, %s25, 1
        %s861 = smul.addr %s860, 2
        %s862 = smul.addr %s861, 8
        %s863 = scalar_lea.vmem %s3, %s862
        // Predicated region
        $region41: #{tpu_custom_call.1} parent=27 // pred_check
          %p864 = pneg %p107
        $region42: #{tpu_custom_call.1} parent=27 // pred_check_branch
          %866 = sbr.rel (%p864) target = $region44
        $region43: #{tpu_custom_call.1} parent=27 // pred_region
          _
        $region44: #{tpu_custom_call.1} parent=27 // pred_fallthru
          _
        // Predicated region
        $region45: #{tpu_custom_call.1} parent=27 // pred_check
          %p867 = pneg %p133
        $region46: #{tpu_custom_call.1} parent=27 // pred_check_branch
          %869 = sbr.rel (%p867) target = $region48
        $region47: #{tpu_custom_call.1} parent=27 // pred_region
          _
        $region48: #{tpu_custom_call.1} parent=27 // pred_fallthru
          _
      $region28: #{tpu_custom_call.1} parent=5 // pred_fallthru
        _
      %p870 = scmp.le.s32.totalorder 2, %s16
      // Predicated region
      $region49: #{tpu_custom_call.1} parent=5 // pred_check
        %p871 = pneg %p870
      $region50: #{tpu_custom_call.1} parent=5 // pred_check_branch
        %873 = sbr.rel (%p871) target = $region52
      $region51: #{tpu_custom_call.1} parent=5 // pred_region
        %s874 = ssub.s32 %s16, 2
        // Predicated region
        $region53: #{tpu_custom_call.1} parent=51 // pred_check
          %p875 = pneg %p113
        $region54: #{tpu_custom_call.1} parent=51 // pred_check_branch
          %877 = sbr.rel (%p875) target = $region56
        $region55: #{tpu_custom_call.1} parent=51 // pred_region
          %p878 = scmp.lt.s32.totalorder %s27, 1
          %s879 = scalar_select %p878, %s27, 1
          %s880 = smul.addr %s879, 2
          %s881 = smul.addr %s880, 8
          %s882 = scalar_lea.vmem %s2, %s881
        $region56: #{tpu_custom_call.1} parent=51 // pred_fallthru
          _
        // Predicated region
        $region57: #{tpu_custom_call.1} parent=51 // pred_check
          %p883 = pneg %p139
        $region58: #{tpu_custom_call.1} parent=51 // pred_check_branch
          %885 = sbr.rel (%p883) target = $region60
        $region59: #{tpu_custom_call.1} parent=51 // pred_region
          %p886 = scmp.lt.s32.totalorder %s27, 1
          %s887 = scalar_select %p886, %s27, 1
          %s888 = smul.addr %s887, 2
          %s889 = smul.addr %s888, 8
          %s890 = scalar_lea.vmem %s3, %s889
        $region60: #{tpu_custom_call.1} parent=51 // pred_fallthru
          _
      $region52: #{tpu_custom_call.1} parent=5 // pred_fallthru
        _
    $region6: #{tpu_custom_call.1} parent=1 // loop_footer
      %s20 = sadd.s32 1, %s16
    $region7: #{tpu_custom_call.1} parent=1 // loop_footer_branch
      %15 = sbr.rel target = $region3
    $region8: #{tpu_custom_call.1} parent=1 // loop_exit
      _
    %891 = vsyncpa [#allocation3], 1
    %s892 = scalar_lea.sflag [#allocation3], 1
    %893 = vsyncpa %s892, 1
    %894 = vsyncpa [#allocation5], 1
    %s895 = scalar_lea.sflag [#allocation5], 1
    %896 = vsyncpa %s895, 1

</llo_original>
